<compile_context>
chip_gen: v7x
topology: tpu7x:2x2x1
jax: 0.10.0
libtpu: 0.0.40
codegen_flags: <defaults>
</compile_context>

<pallas_src>
import jax
import jax.numpy as jnp
from jax.experimental import pallas as pl
from jax.experimental.pallas import tpu as pltpu


def _head_kernel(x_ref, we_ref, w1_ref, b1_ref, w2_ref, b2_ref, w3_ref, b3_ref,
                 out_ref):
    # Hoisted bias loads (f32) -- loaded once, not re-indexed per layer.
    b1 = b1_ref[...]
    b2 = b2_ref[...]
    b3 = b3_ref[...]

    # --- frozen spectra encoder: linear projection to latent space -----------
    # Encoder bias is folded into b1 offline (frozen encoder), so no add here.
    x = x_ref[...]                                                    # (TB, SPEC_P) bf16
    h = jnp.dot(x, we_ref[...], preferred_element_type=jnp.float32)   # (TB, FLAT_P) f32

    # --- h.view(B, -1) is identity here (already flat) -----------------------

    # --- MLP head: in -> 64 -> 64 -> outdim, ReLU on hidden layers -----------
    h = jnp.dot(h.astype(jnp.bfloat16), w1_ref[...],
                preferred_element_type=jnp.float32) + b1
    h = jnp.maximum(h, 0.0)
    h = jnp.dot(h.astype(jnp.bfloat16), w2_ref[...],
                preferred_element_type=jnp.float32) + b2
    h = jnp.maximum(h, 0.0)
    y = jnp.dot(h.astype(jnp.bfloat16), w3_ref[...],
                preferred_element_type=jnp.float32) + b3

    out_ref[...] = y.astype(out_ref.dtype)


def _round_up(n, m):
    return ((n + m - 1) // m) * m


def _pad2(a, rows, cols):
    r, c = a.shape
    return jnp.pad(a, ((0, rows - r), (0, cols - c)))


def contras_spec_regression_head(x, params, outdim):
    """Fused (stand-in) encoder + flatten + MLP head as one Pallas kernel.

    x:      (B, spec_len) float32
    params: (we, be, w1, b1, w2, b2, w3, b3) float32, weights as (in, out),
            biases as (1, out).
    """
    we, be, w1, b1, w2, b2, w3, b3 = params
    B, spec_len = x.shape
    flat = we.shape[1]
    hid1 = w1.shape[1]
    hid2 = w2.shape[1]
    assert w3.shape[1] == outdim

    # ---- lane / batch padding ------------------------------------------------
    SPEC_P = _round_up(spec_len, 128)
    FLAT_P = _round_up(flat, 128)
    H1_P = _round_up(hid1, 128)
    H2_P = _round_up(hid2, 128)
    OUT_P = _round_up(outdim, 128)

    TB = 128 if B >= 128 else _round_up(B, 8)
    B_pad = _round_up(B, TB)
    grid = (B_pad // TB,)

    # Frozen encoder: fold encoder bias into the first MLP bias (exact in f32).
    b1_eff = be @ w1 + b1                                   # (1, hid1)

    # Zero-padded, bf16 weights (cast once, outside the kernel); f32 biases.
    x_p = _pad2(x, B_pad, SPEC_P).astype(jnp.bfloat16)
    we_p = _pad2(we, SPEC_P, FLAT_P).astype(jnp.bfloat16)
    w1_p = _pad2(w1, FLAT_P, H1_P).astype(jnp.bfloat16)
    w2_p = _pad2(w2, H1_P, H2_P).astype(jnp.bfloat16)
    w3_p = _pad2(w3, H2_P, OUT_P).astype(jnp.bfloat16)
    b1_p = _pad2(b1_eff, 1, H1_P).astype(jnp.float32)
    b2_p = _pad2(b2, 1, H2_P).astype(jnp.float32)
    b3_p = _pad2(b3, 1, OUT_P).astype(jnp.float32)

    weight_args = (we_p, w1_p, b1_p, w2_p, b2_p, w3_p, b3_p)

    # Weights/biases: constant index_map -> resident in VMEM across grid steps.
    def _resident(shape):
        return pl.BlockSpec(shape, lambda i: (0, 0))

    cost = pl.CostEstimate(
        flops=2 * B_pad * (SPEC_P * FLAT_P + FLAT_P * H1_P
                           + H1_P * H2_P + H2_P * OUT_P),
        transcendentals=0,
        bytes_accessed=(x_p.size * x_p.dtype.itemsize
                        + sum(int(p.size) * p.dtype.itemsize for p in weight_args)
                        + B_pad * OUT_P * 4),
    )

    out_padded = pl.pallas_call(
        _head_kernel,
        out_shape=jax.ShapeDtypeStruct((B_pad, OUT_P), jnp.float32),
        grid_spec=pltpu.PrefetchScalarGridSpec(
            num_scalar_prefetch=0,
            grid=grid,
            in_specs=[
                pl.BlockSpec((TB, SPEC_P), lambda i: (i, 0)),   # x: tiled over batch
                _resident(we_p.shape),
                _resident(w1_p.shape),
                _resident(b1_p.shape),
                _resident(w2_p.shape),
                _resident(b2_p.shape),
                _resident(w3_p.shape),
                _resident(b3_p.shape),
            ],
            out_specs=pl.BlockSpec((TB, OUT_P), lambda i: (i, 0)),
        ),
        compiler_params=pltpu.CompilerParams(
            dimension_semantics=("parallel",),
        ),
        cost_estimate=cost,
    )(x_p, *weight_args)

    return out_padded[:B, :outdim]


def _init_linear(key, fan_in, fan_out):
    """Deterministic Kaiming-uniform-ish init (matches nn.Linear shapes)."""
    kw, kb = jax.random.split(key)
    bound = 1.0 / jnp.sqrt(jnp.float32(fan_in))
    w = jax.random.uniform(kw, (fan_in, fan_out), jnp.float32, -bound, bound)
    b = jax.random.uniform(kb, (1, fan_out), jnp.float32, -bound, bound)
    return w, b


def _reference(x, params):
    we, be, w1, b1, w2, b2, w3, b3 = params
    h = x @ we + be
    h = jnp.maximum(h @ w1 + b1, 0.0)
    h = jnp.maximum(h @ w2 + b2, 0.0)
    return h @ w3 + b3


if __name__ == "__main__":
    # Small shapes consistent with the module's forward.
    B = 2            # batch
    SPEC_LEN = 32    # input spectrum length
    LATENT_LEN = 8   # contrastnet.latent_len
    LATENT_DIM = 4   # contrastnet.latent_dim
    FLAT = LATENT_LEN * LATENT_DIM   # 32 = MLP input dim
    HID = 64                         # MLPlatent = [64, 64]
    OUTDIM = 3

    root = jax.random.PRNGKey(0)
    k_x, k_e, k_1, k_2, k_3 = jax.random.split(root, 5)

    x = jax.random.normal(k_x, (B, SPEC_LEN), jnp.float32)

    we, be = _init_linear(k_e, SPEC_LEN, FLAT)   # frozen spectra encoder (stand-in)
    w1, b1 = _init_linear(k_1, FLAT, HID)        # MLP layer 1
    w2, b2 = _init_linear(k_2, HID, HID)         # MLP layer 2
    w3, b3 = _init_linear(k_3, HID, OUTDIM)      # MLP output layer

    params = (we, be, w1, b1, w2, b2, w3, b3)

    out = contras_spec_regression_head(x, params, OUTDIM)
    out = jax.block_until_ready(out)

    ref = _reference(x, params)
    assert out.shape == (B, OUTDIM)
    # bf16 MXU inputs with f32 accumulation -> relaxed tolerance vs. f32 reference.
    assert jnp.allclose(out, ref, atol=5e-2, rtol=5e-2), (out, ref)

    print("KERNEL_OK")
</pallas_src>

<mosaic_0001>
module attributes {stable_mosaic.version = 11 : i64} {
  func.func @_head_kernel(%arg0: i32, %arg1: memref<8x128xbf16, #tpu.memory_space<vmem>>, %arg2: memref<128x128xbf16, #tpu.memory_space<vmem>>, %arg3: memref<128x128xbf16, #tpu.memory_space<vmem>>, %arg4: memref<1x128xf32, #tpu.memory_space<vmem>>, %arg5: memref<128x128xbf16, #tpu.memory_space<vmem>>, %arg6: memref<1x128xf32, #tpu.memory_space<vmem>>, %arg7: memref<128x128xbf16, #tpu.memory_space<vmem>>, %arg8: memref<1x128xf32, #tpu.memory_space<vmem>>, %arg9: memref<8x128xf32, #tpu.memory_space<vmem>>) attributes {dimension_semantics = [#tpu.dimension_semantics<parallel>], iteration_bounds = array<i64: 1>, scalar_prefetch = 0 : i64, scratch_operands = 0 : i64, tpu.core_type = #tpu.core_type<tc>, window_params = [{transform_indices = @transform_0, window_bounds = array<i64: 8, 128>}, {pipeline_mode = #tpu.pipeline_mode<synchronous>, transform_indices = @transform_1, window_bounds = array<i64: 128, 128>}, {pipeline_mode = #tpu.pipeline_mode<synchronous>, transform_indices = @transform_2, window_bounds = array<i64: 128, 128>}, {pipeline_mode = #tpu.pipeline_mode<synchronous>, transform_indices = @transform_3, window_bounds = array<i64: 1, 128>}, {pipeline_mode = #tpu.pipeline_mode<synchronous>, transform_indices = @transform_4, window_bounds = array<i64: 128, 128>}, {pipeline_mode = #tpu.pipeline_mode<synchronous>, transform_indices = @transform_5, window_bounds = array<i64: 1, 128>}, {pipeline_mode = #tpu.pipeline_mode<synchronous>, transform_indices = @transform_6, window_bounds = array<i64: 128, 128>}, {pipeline_mode = #tpu.pipeline_mode<synchronous>, transform_indices = @transform_7, window_bounds = array<i64: 1, 128>}, {transform_indices = @transform_8, window_bounds = array<i64: 8, 128>}]} {
    %c0 = arith.constant 0 : index
    %c0_0 = arith.constant 0 : index
    %0 = vector.load %arg4[%c0, %c0_0] : memref<1x128xf32, #tpu.memory_space<vmem>>, vector<1x128xf32>
    %c0_1 = arith.constant 0 : index
    %c0_2 = arith.constant 0 : index
    %1 = vector.load %arg6[%c0_1, %c0_2] : memref<1x128xf32, #tpu.memory_space<vmem>>, vector<1x128xf32>
    %c0_3 = arith.constant 0 : index
    %c0_4 = arith.constant 0 : index
    %2 = vector.load %arg8[%c0_3, %c0_4] : memref<1x128xf32, #tpu.memory_space<vmem>>, vector<1x128xf32>
    %c0_5 = arith.constant 0 : index
    %c0_6 = arith.constant 0 : index
    %3 = vector.load %arg1[%c0_5, %c0_6] : memref<8x128xbf16, #tpu.memory_space<vmem>>, vector<8x128xbf16>
    %c0_7 = arith.constant 0 : index
    %c0_8 = arith.constant 0 : index
    %4 = vector.load %arg2[%c0_7, %c0_8] : memref<128x128xbf16, #tpu.memory_space<vmem>>, vector<128x128xbf16>
    %cst = arith.constant dense<0.000000e+00> : vector<8x128xf32>
    %5 = tpu.matmul %3, %4, %cst {dimension_numbers = #tpu.dot_dimension_numbers<[1], [0], [0], [1], [0, 0, 1, 1], [], []>} : vector<8x128xbf16>, vector<128x128xbf16>, vector<8x128xf32> -> vector<8x128xf32>
    %6 = arith.truncf %5 : vector<8x128xf32> to vector<8x128xbf16>
    %c0_9 = arith.constant 0 : index
    %c0_10 = arith.constant 0 : index
    %7 = vector.load %arg3[%c0_9, %c0_10] : memref<128x128xbf16, #tpu.memory_space<vmem>>, vector<128x128xbf16>
    %cst_11 = arith.constant dense<0.000000e+00> : vector<8x128xf32>
    %8 = tpu.matmul %6, %7, %cst_11 {dimension_numbers = #tpu.dot_dimension_numbers<[1], [0], [0], [1], [0, 0, 1, 1], [], []>} : vector<8x128xbf16>, vector<128x128xbf16>, vector<8x128xf32> -> vector<8x128xf32>
    %9 = vector.broadcast %0 : vector<1x128xf32> to vector<8x128xf32>
    %10 = arith.addf %8, %9 : vector<8x128xf32>
    %cst_12 = arith.constant 0.000000e+00 : f32
    %11 = vector.broadcast %cst_12 : f32 to vector<8x128xf32>
    %12 = arith.maximumf %10, %11 : vector<8x128xf32>
    %13 = arith.truncf %12 : vector<8x128xf32> to vector<8x128xbf16>
    %c0_13 = arith.constant 0 : index
    %c0_14 = arith.constant 0 : index
    %14 = vector.load %arg5[%c0_13, %c0_14] : memref<128x128xbf16, #tpu.memory_space<vmem>>, vector<128x128xbf16>
    %cst_15 = arith.constant dense<0.000000e+00> : vector<8x128xf32>
    %15 = tpu.matmul %13, %14, %cst_15 {dimension_numbers = #tpu.dot_dimension_numbers<[1], [0], [0], [1], [0, 0, 1, 1], [], []>} : vector<8x128xbf16>, vector<128x128xbf16>, vector<8x128xf32> -> vector<8x128xf32>
    %16 = vector.broadcast %1 : vector<1x128xf32> to vector<8x128xf32>
    %17 = arith.addf %15, %16 : vector<8x128xf32>
    %cst_16 = arith.constant 0.000000e+00 : f32
    %18 = vector.broadcast %cst_16 : f32 to vector<8x128xf32>
    %19 = arith.maximumf %17, %18 : vector<8x128xf32>
    %20 = arith.truncf %19 : vector<8x128xf32> to vector<8x128xbf16>
    %c0_17 = arith.constant 0 : index
    %c0_18 = arith.constant 0 : index
    %21 = vector.load %arg7[%c0_17, %c0_18] : memref<128x128xbf16, #tpu.memory_space<vmem>>, vector<128x128xbf16>
    %cst_19 = arith.constant dense<0.000000e+00> : vector<8x128xf32>
    %22 = tpu.matmul %20, %21, %cst_19 {dimension_numbers = #tpu.dot_dimension_numbers<[1], [0], [0], [1], [0, 0, 1, 1], [], []>} : vector<8x128xbf16>, vector<128x128xbf16>, vector<8x128xf32> -> vector<8x128xf32>
    %23 = vector.broadcast %2 : vector<1x128xf32> to vector<8x128xf32>
    %24 = arith.addf %22, %23 : vector<8x128xf32>
    %c0_20 = arith.constant 0 : index
    %c0_21 = arith.constant 0 : index
    %25 = vector.load %arg9[%c0_20, %c0_21] : memref<8x128xf32, #tpu.memory_space<vmem>>, vector<8x128xf32>
    tpu.vector_store %arg9[%c0_20, %c0_21], %24 {strides = array<i32>} : memref<8x128xf32, #tpu.memory_space<vmem>>, vector<8x128xf32>,
    return
  }
  func.func @transform_0(%arg0: i32) -> (i32, i32) {
    %c0_i32 = arith.constant 0 : i32
    %c0_i32_0 = arith.constant 0 : i32
    return %arg0, %c0_i32 : i32, i32
  }
  func.func @transform_1(%arg0: i32) -> (i32, i32) {
    %c0_i32 = arith.constant 0 : i32
    %c0_i32_0 = arith.constant 0 : i32
    %c0_i32_1 = arith.constant 0 : i32
    return %c0_i32, %c0_i32_0 : i32, i32
  }
  func.func @transform_2(%arg0: i32) -> (i32, i32) {
    %c0_i32 = arith.constant 0 : i32
    %c0_i32_0 = arith.constant 0 : i32
    %c0_i32_1 = arith.constant 0 : i32
    return %c0_i32, %c0_i32_0 : i32, i32
  }
  func.func @transform_3(%arg0: i32) -> (i32, i32) {
    %c0_i32 = arith.constant 0 : i32
    %c0_i32_0 = arith.constant 0 : i32
    %c0_i32_1 = arith.constant 0 : i32
    return %c0_i32, %c0_i32_0 : i32, i32
  }
  func.func @transform_4(%arg0: i32) -> (i32, i32) {
    %c0_i32 = arith.constant 0 : i32
    %c0_i32_0 = arith.constant 0 : i32
    %c0_i32_1 = arith.constant 0 : i32
    return %c0_i32, %c0_i32_0 : i32, i32
  }
  func.func @transform_5(%arg0: i32) -> (i32, i32) {
    %c0_i32 = arith.constant 0 : i32
    %c0_i32_0 = arith.constant 0 : i32
    %c0_i32_1 = arith.constant 0 : i32
    return %c0_i32, %c0_i32_0 : i32, i32
  }
  func.func @transform_6(%arg0: i32) -> (i32, i32) {
    %c0_i32 = arith.constant 0 : i32
    %c0_i32_0 = arith.constant 0 : i32
    %c0_i32_1 = arith.constant 0 : i32
    return %c0_i32, %c0_i32_0 : i32, i32
  }
  func.func @transform_7(%arg0: i32) -> (i32, i32) {
    %c0_i32 = arith.constant 0 : i32
    %c0_i32_0 = arith.constant 0 : i32
    %c0_i32_1 = arith.constant 0 : i32
    return %c0_i32, %c0_i32_0 : i32, i32
  }
  func.func @transform_8(%arg0: i32) -> (i32, i32) {
    %c0_i32 = arith.constant 0 : i32
    %c0_i32_0 = arith.constant 0 : i32
    return %arg0, %c0_i32 : i32, i32
  }
}

</mosaic_0001>

<llo_original>
// kernel: tpu_custom_call.1
$region0: #{tpu_custom_call.1}
  #allocation0 [shape = 'u32[]', space=smem, size = 0x4, offset = 0x4, fixed_abs, tag = 'smem constant byte address 0x4 - core index']
  #allocation1 [shape = 'u32[144,128]{1,0:T(1,128)}', space=vmem, size = 0x12000, scoped, tag = 'internal scratch']
  %s0 = inlined_call_operand.hbm [shape: bf16[8,128], index: 0, kind: input, shape index: {}]
  %s1 = inlined_call_operand.hbm [shape: bf16[128,128], index: 1, kind: input, shape index: {}]
  %s2 = inlined_call_operand.hbm [shape: bf16[128,128], index: 2, kind: input, shape index: {}]
  %s3 = inlined_call_operand.vmem [shape: f32[1,128], index: 3, kind: input, shape index: {}]
  %s4 = inlined_call_operand.hbm [shape: bf16[128,128], index: 4, kind: input, shape index: {}]
  %s5 = inlined_call_operand.vmem [shape: f32[1,128], index: 5, kind: input, shape index: {}]
  %s6 = inlined_call_operand.hbm [shape: bf16[128,128], index: 6, kind: input, shape index: {}]
  %s7 = inlined_call_operand.vmem [shape: f32[1,128], index: 7, kind: input, shape index: {}]
  %s8 = inlined_call_operand.hbm [shape: f32[8,128], index: 8, kind: output, shape index: {}]
  %s9 = sld [smem:[#allocation0]]
  $region62: #{tpu_custom_call.1} parent=0
    _
  %s11 = ssub.s32 1, %s9
  %s12 = scalar_select 0, %s11, %s9
  $region1: #{tpu_custom_call.1} parent=0
    #allocation2 [shape = 'u8[2048]{0}', space=vmem, size = 0x800, scoped, tag = 'input window, operand 0, single buffered']
    #allocation3 [shape = 's32[1]{0}', space=sflag, size = 0x4, scoped, tag = 'scoped memory for tpu_custom_call.1']
    #allocation4 [shape = 's32[1]{0}', space=sflag, size = 0x4, scoped, tag = 'scoped memory for tpu_custom_call.1']
    #allocation5 [shape = 'u8[32768]{0}', space=vmem, size = 0x8000, scoped, tag = 'input window, operand 1, single buffered']
    #allocation6 [shape = 's32[1]{0}', space=sflag, size = 0x4, scoped, tag = 'scoped memory for tpu_custom_call.1']
    #allocation7 [shape = 'u8[32768]{0}', space=vmem, size = 0x8000, scoped, tag = 'input window, operand 2, single buffered']
    #allocation8 [shape = 'u8[32768]{0}', space=vmem, size = 0x8000, scoped, tag = 'input window, operand 4, single buffered']
    #allocation9 [shape = 's32[1]{0}', space=sflag, size = 0x4, scoped, tag = 'scoped memory for tpu_custom_call.1']
    #allocation10 [shape = 'u8[32768]{0}', space=vmem, size = 0x8000, scoped, tag = 'input window, operand 6, single buffered']
    #allocation11 [shape = 'u8[4096]{0}', space=vmem, size = 0x1000, scoped, tag = 'output window, operand 0, single buffered']
    %13 = vsyncpa [#allocation3], 0
    %14 = vsyncpa [#allocation6], 0
    %15 = vsyncpa [#allocation9], 0
    %16 = vsyncpa [#allocation4], 0
    // Predicated region
    $region2: #{tpu_custom_call.1} parent=1 // pred_check
      _
    $region3: #{tpu_custom_call.1} parent=1 // pred_check_branch
      %18 = sbr.rel (0) target = $region5
    $region4: #{tpu_custom_call.1} parent=1 // pred_region
      %s20 = ssub.s32 64, 64
      %21 = vsyncadd [#allocation3], %s20
      %s23 = sshll.u32 [#allocation2], 4
      %s24 = int_to_ptr.vmem [resolvable:$true] %s23
      %26 = dma.hbm_to_vmem [thread:$0]  %s0, 64, %s24, [#allocation3]
    $region5: #{tpu_custom_call.1} parent=1 // pred_fallthru
      _
    // Predicated region
    $region6: #{tpu_custom_call.1} parent=1 // pred_check
      _
    $region7: #{tpu_custom_call.1} parent=1 // pred_check_branch
      %28 = sbr.rel (0) target = $region9
    $region8: #{tpu_custom_call.1} parent=1 // pred_region
      %s30 = ssub.s32 1024, 1024
      %31 = vsyncadd [#allocation6], %s30
      %s32 = sshll.u32 [#allocation5], 4
      %s33 = int_to_ptr.vmem [resolvable:$true] %s32
      %38 = dma.hbm_to_vmem [thread:$0]  %s1, 1024, %s33, [#allocation6], 64, 64, 4
    $region9: #{tpu_custom_call.1} parent=1 // pred_fallthru
      _
    // Predicated region
    $region10: #{tpu_custom_call.1} parent=1 // pred_check
      _
    $region11: #{tpu_custom_call.1} parent=1 // pred_check_branch
      %40 = sbr.rel (0) target = $region13
    $region12: #{tpu_custom_call.1} parent=1 // pred_region
      %s42 = ssub.s32 1024, 1024
      %43 = vsyncadd [#allocation6], %s42
      %s44 = sshll.u32 [#allocation7], 4
      %s45 = int_to_ptr.vmem [resolvable:$true] %s44
      %50 = dma.hbm_to_vmem [thread:$0]  %s2, 1024, %s45, [#allocation6], 64, 64, 4
    $region13: #{tpu_custom_call.1} parent=1 // pred_fallthru
      _
    // Predicated region
    $region14: #{tpu_custom_call.1} parent=1 // pred_check
      _
    $region15: #{tpu_custom_call.1} parent=1 // pred_check_branch
      %52 = sbr.rel (0) target = $region17
    $region16: #{tpu_custom_call.1} parent=1 // pred_region
      _
    $region17: #{tpu_custom_call.1} parent=1 // pred_fallthru
      _
    // Predicated region
    $region18: #{tpu_custom_call.1} parent=1 // pred_check
      _
    $region19: #{tpu_custom_call.1} parent=1 // pred_check_branch
      %54 = sbr.rel (0) target = $region21
    $region20: #{tpu_custom_call.1} parent=1 // pred_region
      %s56 = ssub.s32 1024, 1024
      %57 = vsyncadd [#allocation9], %s56
      %s58 = sshll.u32 [#allocation8], 4
      %s59 = int_to_ptr.vmem [resolvable:$true] %s58
      %64 = dma.hbm_to_vmem [thread:$0]  %s4, 1024, %s59, [#allocation9], 64, 64, 4
    $region21: #{tpu_custom_call.1} parent=1 // pred_fallthru
      _
    // Predicated region
    $region22: #{tpu_custom_call.1} parent=1 // pred_check
      _
    $region23: #{tpu_custom_call.1} parent=1 // pred_check_branch
      %66 = sbr.rel (0) target = $region25
    $region24: #{tpu_custom_call.1} parent=1 // pred_region
      _
    $region25: #{tpu_custom_call.1} parent=1 // pred_fallthru
      _
    // Predicated region
    $region26: #{tpu_custom_call.1} parent=1 // pred_check
      _
    $region27: #{tpu_custom_call.1} parent=1 // pred_check_branch
      %68 = sbr.rel (0) target = $region29
    $region28: #{tpu_custom_call.1} parent=1 // pred_region
      %s70 = ssub.s32 1024, 1024
      %71 = vsyncadd [#allocation9], %s70
      %s72 = sshll.u32 [#allocation10], 4
      %s73 = int_to_ptr.vmem [resolvable:$true] %s72
      %78 = dma.hbm_to_vmem [thread:$0]  %s6, 1024, %s73, [#allocation9], 64, 64, 4
    $region29: #{tpu_custom_call.1} parent=1 // pred_fallthru
      _
    // Predicated region
    $region30: #{tpu_custom_call.1} parent=1 // pred_check
      _
    $region31: #{tpu_custom_call.1} parent=1 // pred_check_branch
      %80 = sbr.rel (0) target = $region33
    $region32: #{tpu_custom_call.1} parent=1 // pred_region
      _
    $region33: #{tpu_custom_call.1} parent=1 // pred_fallthru
      _
    // Predicated region
    $region34: #{tpu_custom_call.1} parent=1 // pred_check
      _
    $region35: #{tpu_custom_call.1} parent=1 // pred_check_branch
      %82 = sbr.rel (0) target = $region37
    $region36: #{tpu_custom_call.1} parent=1 // pred_region
      %83 = dma.done [#allocation3], 64
    $region37: #{tpu_custom_call.1} parent=1 // pred_fallthru
      _
    // Predicated region
    $region38: #{tpu_custom_call.1} parent=1 // pred_check
      _
    $region39: #{tpu_custom_call.1} parent=1 // pred_check_branch
      %85 = sbr.rel (0) target = $region41
    $region40: #{tpu_custom_call.1} parent=1 // pred_region
      %86 = dma.done [#allocation6], 1024
    $region41: #{tpu_custom_call.1} parent=1 // pred_fallthru
      _
    // Predicated region
    $region42: #{tpu_custom_call.1} parent=1 // pred_check
      _
    $region43: #{tpu_custom_call.1} parent=1 // pred_check_branch
      %88 = sbr.rel (0) target = $region45
    $region44: #{tpu_custom_call.1} parent=1 // pred_region
      %89 = dma.done [#allocation6], 1024
    $region45: #{tpu_custom_call.1} parent=1 // pred_fallthru
      _
    // Predicated region
    $region46: #{tpu_custom_call.1} parent=1 // pred_check
      _
    $region47: #{tpu_custom_call.1} parent=1 // pred_check_branch
      %91 = sbr.rel (0) target = $region49
    $region48: #{tpu_custom_call.1} parent=1 // pred_region
      %92 = dma.done [#allocation9], 1024
    $region49: #{tpu_custom_call.1} parent=1 // pred_fallthru
      _
    // Predicated region
    $region50: #{tpu_custom_call.1} parent=1 // pred_check
      _
    $region51: #{tpu_custom_call.1} parent=1 // pred_check_branch
      %94 = sbr.rel (0) target = $region53
    $region52: #{tpu_custom_call.1} parent=1 // pred_region
      %95 = dma.done [#allocation9], 1024
    $region53: #{tpu_custom_call.1} parent=1 // pred_fallthru
      _
    %v97 = vld [vmem:[%s3] sm:$0x1]
    %v98 = vld [vmem:[%s5] sm:$0x1]
    %v99 = vld [vmem:[%s7] sm:$0x1]
    %v100 = vld [vmem:[#allocation2] sm:$0xf]
    %v101 = vld [vmem:[#allocation5] sm:$0xf]
    %v102 = vld [vmem:[#allocation5 + $0x4] sm:$0xf]
    %v103 = vld [vmem:[#allocation5 + $0x8] sm:$0xf]
    %v104 = vld [vmem:[#allocation5 + $0xc] sm:$0xf]
    %v105 = vld [vmem:[#allocation5 + $0x10] sm:$0xf]
    %v106 = vld [vmem:[#allocation5 + $0x14] sm:$0xf]
    %v107 = vld [vmem:[#allocation5 + $0x18] sm:$0xf]
    %v108 = vld [vmem:[#allocation5 + $0x1c] sm:$0xf]
    %v109 = vld [vmem:[#allocation5 + $0x20] sm:$0xf]
    %v110 = vld [vmem:[#allocation5 + $0x24] sm:$0xf]
    %v111 = vld [vmem:[#allocation5 + $0x28] sm:$0xf]
    %v112 = vld [vmem:[#allocation5 + $0x2c] sm:$0xf]
    %v113 = vld [vmem:[#allocation5 + $0x30] sm:$0xf]
    %v114 = vld [vmem:[#allocation5 + $0x34] sm:$0xf]
    %v115 = vld [vmem:[#allocation5 + $0x38] sm:$0xf]
    %v116 = vld [vmem:[#allocation5 + $0x3c] sm:$0xf]
    %v133 = vunpack.c.l.b16 %v101
    %v134 = vunpack.c.l.b16 %v102
    %v135 = vunpack.c.l.b16 %v103
    %v136 = vunpack.c.l.b16 %v104
    %v137 = vunpack.c.l.b16 %v105
    %v138 = vunpack.c.l.b16 %v106
    %v139 = vunpack.c.l.b16 %v107
    %v140 = vunpack.c.l.b16 %v108
    %v141 = vunpack.c.l.b16 %v109
    %v142 = vunpack.c.l.b16 %v110
    %v143 = vunpack.c.l.b16 %v111
    %v144 = vunpack.c.l.b16 %v112
    %v145 = vunpack.c.l.b16 %v113
    %v146 = vunpack.c.l.b16 %v114
    %v147 = vunpack.c.l.b16 %v115
    %v148 = vunpack.c.l.b16 %v116
    %v149 = vpack.c.b16 %v134, %v133
    %v150 = vpack.c.b16 %v136, %v135
    %v151 = vpack.c.b16 %v138, %v137
    %v152 = vpack.c.b16 %v140, %v139
    %v153 = vpack.c.b16 %v142, %v141
    %v154 = vpack.c.b16 %v144, %v143
    %v155 = vpack.c.b16 %v146, %v145
    %v156 = vpack.c.b16 %v148, %v147
    %165 = vmatprep.subr.bf16.mxu0 0
    %166 = vmatpush1.bf16.msra.mxu0 %v149
    %167 = vmatprep.subr.bf16.mxu0 0
    %168 = vmatpush1.bf16.msra.mxu0 %v150
    %169 = vmatprep.subr.bf16.mxu0 0
    %170 = vmatpush1.bf16.msra.mxu0 %v151
    %171 = vmatprep.subr.bf16.mxu0 0
    %172 = vmatpush1.bf16.msra.mxu0 %v152
    %173 = vmatprep.subr.bf16.mxu0 0
    %174 = vmatpush1.bf16.msra.mxu0 %v153
    %175 = vmatprep.subr.bf16.mxu0 0
    %176 = vmatpush1.bf16.msra.mxu0 %v154
    %177 = vmatprep.subr.bf16.mxu0 0
    %178 = vmatpush1.bf16.msra.mxu0 %v155
    %179 = vmatprep.subr.bf16.mxu0 0
    %180 = vmatpush1.bf16.msra.mxu0 %v156
    %181 = vmatprep.subr.bf16.mxu0 0
    %182 = vmatpush1.bf16.msra.mxu0 0
    %183 = vmatprep.subr.bf16.mxu0 0
    %184 = vmatpush1.bf16.msra.mxu0 0
    %185 = vmatprep.subr.bf16.mxu0 0
    %186 = vmatpush1.bf16.msra.mxu0 0
    %187 = vmatprep.subr.bf16.mxu0 0
    %188 = vmatpush1.bf16.msra.mxu0 0
    %189 = vmatprep.subr.bf16.mxu0 0
    %190 = vmatpush1.bf16.msra.mxu0 0
    %191 = vmatprep.subr.bf16.mxu0 0
    %192 = vmatpush1.bf16.msra.mxu0 0
    %193 = vmatprep.subr.bf16.mxu0 0
    %194 = vmatpush1.bf16.msra.mxu0 0
    %195 = vmatprep.subr.bf16.mxu0 0
    %196 = vmatpush1.bf16.msra.mxu0 0
    %197 = vmatprep.mubr.bf16.mxu0 0
    %198 = vmatmul.mubr.bf16.gmra.mrb[0].mxu0 %v100
    %v199 = vpop.f32.mrb[0].mxu0
    %v200 = vadd.f32 0.0, %v199
    %v201 = vpop.f32.mrb[0].mxu0
    %v202 = vpop.f32.mrb[0].mxu0
    %v203 = vpop.f32.mrb[0].mxu0
    %204 = vdwg.mxu0
    %v205 = vpack.c.bf16 %v200, %v200
    %v206 = vld [vmem:[#allocation7] sm:$0xf]
    %v207 = vld [vmem:[#allocation7 + $0x4] sm:$0xf]
    %v208 = vld [vmem:[#allocation7 + $0x8] sm:$0xf]
    %v209 = vld [vmem:[#allocation7 + $0xc] sm:$0xf]
    %v210 = vld [vmem:[#allocation7 + $0x10] sm:$0xf]
    %v211 = vld [vmem:[#allocation7 + $0x14] sm:$0xf]
    %v212 = vld [vmem:[#allocation7 + $0x18] sm:$0xf]
    %v213 = vld [vmem:[#allocation7 + $0x1c] sm:$0xf]
    %v214 = vld [vmem:[#allocation7 + $0x20] sm:$0xf]
    %v215 = vld [vmem:[#allocation7 + $0x24] sm:$0xf]
    %v216 = vld [vmem:[#allocation7 + $0x28] sm:$0xf]
    %v217 = vld [vmem:[#allocation7 + $0x2c] sm:$0xf]
    %v218 = vld [vmem:[#allocation7 + $0x30] sm:$0xf]
    %v219 = vld [vmem:[#allocation7 + $0x34] sm:$0xf]
    %v220 = vld [vmem:[#allocation7 + $0x38] sm:$0xf]
    %v221 = vld [vmem:[#allocation7 + $0x3c] sm:$0xf]
    %v223 = vlaneseq
    %v224 = vshrl.u32 %v223, 7
    %v225 = vsub.s32 0, %v224
    %v226 = vrot.slane %v97, %v225
    %v244 = vunpack.c.l.b16 %v206
    %v245 = vunpack.c.l.b16 %v207
    %v246 = vunpack.c.l.b16 %v208
    %v247 = vunpack.c.l.b16 %v209
    %v248 = vunpack.c.l.b16 %v210
    %v249 = vunpack.c.l.b16 %v211
    %v250 = vunpack.c.l.b16 %v212
    %v251 = vunpack.c.l.b16 %v213
    %v252 = vunpack.c.l.b16 %v214
    %v253 = vunpack.c.l.b16 %v215
    %v254 = vunpack.c.l.b16 %v216
    %v255 = vunpack.c.l.b16 %v217
    %v256 = vunpack.c.l.b16 %v218
    %v257 = vunpack.c.l.b16 %v219
    %v258 = vunpack.c.l.b16 %v220
    %v259 = vunpack.c.l.b16 %v221
    %v260 = vpack.c.b16 %v245, %v244
    %v261 = vpack.c.b16 %v247, %v246
    %v262 = vpack.c.b16 %v249, %v248
    %v263 = vpack.c.b16 %v251, %v250
    %v264 = vpack.c.b16 %v253, %v252
    %v265 = vpack.c.b16 %v255, %v254
    %v266 = vpack.c.b16 %v257, %v256
    %v267 = vpack.c.b16 %v259, %v258
    %276 = vmatprep.subr.bf16.mxu0 0
    %277 = vmatpush1.bf16.msra.mxu0 %v260
    %278 = vmatprep.subr.bf16.mxu0 0
    %279 = vmatpush1.bf16.msra.mxu0 %v261
    %280 = vmatprep.subr.bf16.mxu0 0
    %281 = vmatpush1.bf16.msra.mxu0 %v262
    %282 = vmatprep.subr.bf16.mxu0 0
    %283 = vmatpush1.bf16.msra.mxu0 %v263
    %284 = vmatprep.subr.bf16.mxu0 0
    %285 = vmatpush1.bf16.msra.mxu0 %v264
    %286 = vmatprep.subr.bf16.mxu0 0
    %287 = vmatpush1.bf16.msra.mxu0 %v265
    %288 = vmatprep.subr.bf16.mxu0 0
    %289 = vmatpush1.bf16.msra.mxu0 %v266
    %290 = vmatprep.subr.bf16.mxu0 0
    %291 = vmatpush1.bf16.msra.mxu0 %v267
    %292 = vmatprep.subr.bf16.mxu0 0
    %293 = vmatpush1.bf16.msra.mxu0 0
    %294 = vmatprep.subr.bf16.mxu0 0
    %295 = vmatpush1.bf16.msra.mxu0 0
    %296 = vmatprep.subr.bf16.mxu0 0
    %297 = vmatpush1.bf16.msra.mxu0 0
    %298 = vmatprep.subr.bf16.mxu0 0
    %299 = vmatpush1.bf16.msra.mxu0 0
    %300 = vmatprep.subr.bf16.mxu0 0
    %301 = vmatpush1.bf16.msra.mxu0 0
    %302 = vmatprep.subr.bf16.mxu0 0
    %303 = vmatpush1.bf16.msra.mxu0 0
    %304 = vmatprep.subr.bf16.mxu0 0
    %305 = vmatpush1.bf16.msra.mxu0 0
    %306 = vmatprep.subr.bf16.mxu0 0
    %307 = vmatpush1.bf16.msra.mxu0 0
    %308 = vmatprep.mubr.bf16.mxu0 0
    %309 = vmatmul.mubr.bf16.gmra.mrb[0].mxu0 %v205
    %v310 = vpop.f32.mrb[0].mxu0
    %v311 = vadd.f32 %v226, %v310
    %v312 = vpop.f32.mrb[0].mxu0
    %v313 = vpop.f32.mrb[0].mxu0
    %v314 = vpop.f32.mrb[0].mxu0
    %315 = vdwg.mxu0
    %v316 = vmax.f32 %v311, 0.0
    %v317 = vpack.c.bf16 %v316, %v316
    %v318 = vld [vmem:[#allocation8] sm:$0xf]
    %v319 = vld [vmem:[#allocation8 + $0x4] sm:$0xf]
    %v320 = vld [vmem:[#allocation8 + $0x8] sm:$0xf]
    %v321 = vld [vmem:[#allocation8 + $0xc] sm:$0xf]
    %v322 = vld [vmem:[#allocation8 + $0x10] sm:$0xf]
    %v323 = vld [vmem:[#allocation8 + $0x14] sm:$0xf]
    %v324 = vld [vmem:[#allocation8 + $0x18] sm:$0xf]
    %v325 = vld [vmem:[#allocation8 + $0x1c] sm:$0xf]
    %v326 = vld [vmem:[#allocation8 + $0x20] sm:$0xf]
    %v327 = vld [vmem:[#allocation8 + $0x24] sm:$0xf]
    %v328 = vld [vmem:[#allocation8 + $0x28] sm:$0xf]
    %v329 = vld [vmem:[#allocation8 + $0x2c] sm:$0xf]
    %v330 = vld [vmem:[#allocation8 + $0x30] sm:$0xf]
    %v331 = vld [vmem:[#allocation8 + $0x34] sm:$0xf]
    %v332 = vld [vmem:[#allocation8 + $0x38] sm:$0xf]
    %v333 = vld [vmem:[#allocation8 + $0x3c] sm:$0xf]
    %v335 = vlaneseq
    %v336 = vshrl.u32 %v335, 7
    %v337 = vsub.s32 0, %v336
    %v338 = vrot.slane %v98, %v337
    %v356 = vunpack.c.l.b16 %v318
    %v357 = vunpack.c.l.b16 %v319
    %v358 = vunpack.c.l.b16 %v320
    %v359 = vunpack.c.l.b16 %v321
    %v360 = vunpack.c.l.b16 %v322
    %v361 = vunpack.c.l.b16 %v323
    %v362 = vunpack.c.l.b16 %v324
    %v363 = vunpack.c.l.b16 %v325
    %v364 = vunpack.c.l.b16 %v326
    %v365 = vunpack.c.l.b16 %v327
    %v366 = vunpack.c.l.b16 %v328
    %v367 = vunpack.c.l.b16 %v329
    %v368 = vunpack.c.l.b16 %v330
    %v369 = vunpack.c.l.b16 %v331
    %v370 = vunpack.c.l.b16 %v332
    %v371 = vunpack.c.l.b16 %v333
    %v372 = vpack.c.b16 %v357, %v356
    %v373 = vpack.c.b16 %v359, %v358
    %v374 = vpack.c.b16 %v361, %v360
    %v375 = vpack.c.b16 %v363, %v362
    %v376 = vpack.c.b16 %v365, %v364
    %v377 = vpack.c.b16 %v367, %v366
    %v378 = vpack.c.b16 %v369, %v368
    %v379 = vpack.c.b16 %v371, %v370
    %388 = vmatprep.subr.bf16.mxu0 0
    %389 = vmatpush1.bf16.msra.mxu0 %v372
    %390 = vmatprep.subr.bf16.mxu0 0
    %391 = vmatpush1.bf16.msra.mxu0 %v373
    %392 = vmatprep.subr.bf16.mxu0 0
    %393 = vmatpush1.bf16.msra.mxu0 %v374
    %394 = vmatprep.subr.bf16.mxu0 0
    %395 = vmatpush1.bf16.msra.mxu0 %v375
    %396 = vmatprep.subr.bf16.mxu0 0
    %397 = vmatpush1.bf16.msra.mxu0 %v376
    %398 = vmatprep.subr.bf16.mxu0 0
    %399 = vmatpush1.bf16.msra.mxu0 %v377
    %400 = vmatprep.subr.bf16.mxu0 0
    %401 = vmatpush1.bf16.msra.mxu0 %v378
    %402 = vmatprep.subr.bf16.mxu0 0
    %403 = vmatpush1.bf16.msra.mxu0 %v379
    %404 = vmatprep.subr.bf16.mxu0 0
    %405 = vmatpush1.bf16.msra.mxu0 0
    %406 = vmatprep.subr.bf16.mxu0 0
    %407 = vmatpush1.bf16.msra.mxu0 0
    %408 = vmatprep.subr.bf16.mxu0 0
    %409 = vmatpush1.bf16.msra.mxu0 0
    %410 = vmatprep.subr.bf16.mxu0 0
    %411 = vmatpush1.bf16.msra.mxu0 0
    %412 = vmatprep.subr.bf16.mxu0 0
    %413 = vmatpush1.bf16.msra.mxu0 0
    %414 = vmatprep.subr.bf16.mxu0 0
    %415 = vmatpush1.bf16.msra.mxu0 0
    %416 = vmatprep.subr.bf16.mxu0 0
    %417 = vmatpush1.bf16.msra.mxu0 0
    %418 = vmatprep.subr.bf16.mxu0 0
    %419 = vmatpush1.bf16.msra.mxu0 0
    %420 = vmatprep.mubr.bf16.mxu0 0
    %421 = vmatmul.mubr.bf16.gmra.mrb[0].mxu0 %v317
    %v422 = vpop.f32.mrb[0].mxu0
    %v423 = vadd.f32 %v338, %v422
    %v424 = vpop.f32.mrb[0].mxu0
    %v425 = vpop.f32.mrb[0].mxu0
    %v426 = vpop.f32.mrb[0].mxu0
    %427 = vdwg.mxu0
    %v428 = vmax.f32 %v423, 0.0
    %v429 = vpack.c.bf16 %v428, %v428
    %v430 = vld [vmem:[#allocation10] sm:$0xf]
    %v431 = vld [vmem:[#allocation10 + $0x4] sm:$0xf]
    %v432 = vld [vmem:[#allocation10 + $0x8] sm:$0xf]
    %v433 = vld [vmem:[#allocation10 + $0xc] sm:$0xf]
    %v434 = vld [vmem:[#allocation10 + $0x10] sm:$0xf]
    %v435 = vld [vmem:[#allocation10 + $0x14] sm:$0xf]
    %v436 = vld [vmem:[#allocation10 + $0x18] sm:$0xf]
    %v437 = vld [vmem:[#allocation10 + $0x1c] sm:$0xf]
    %v438 = vld [vmem:[#allocation10 + $0x20] sm:$0xf]
    %v439 = vld [vmem:[#allocation10 + $0x24] sm:$0xf]
    %v440 = vld [vmem:[#allocation10 + $0x28] sm:$0xf]
    %v441 = vld [vmem:[#allocation10 + $0x2c] sm:$0xf]
    %v442 = vld [vmem:[#allocation10 + $0x30] sm:$0xf]
    %v443 = vld [vmem:[#allocation10 + $0x34] sm:$0xf]
    %v444 = vld [vmem:[#allocation10 + $0x38] sm:$0xf]
    %v445 = vld [vmem:[#allocation10 + $0x3c] sm:$0xf]
    %v447 = vlaneseq
    %v448 = vshrl.u32 %v447, 7
    %v449 = vsub.s32 0, %v448
    %v450 = vrot.slane %v99, %v449
    %v468 = vunpack.c.l.b16 %v430
    %v469 = vunpack.c.l.b16 %v431
    %v470 = vunpack.c.l.b16 %v432
    %v471 = vunpack.c.l.b16 %v433
    %v472 = vunpack.c.l.b16 %v434
    %v473 = vunpack.c.l.b16 %v435
    %v474 = vunpack.c.l.b16 %v436
    %v475 = vunpack.c.l.b16 %v437
    %v476 = vunpack.c.l.b16 %v438
    %v477 = vunpack.c.l.b16 %v439
    %v478 = vunpack.c.l.b16 %v440
    %v479 = vunpack.c.l.b16 %v441
    %v480 = vunpack.c.l.b16 %v442
    %v481 = vunpack.c.l.b16 %v443
    %v482 = vunpack.c.l.b16 %v444
    %v483 = vunpack.c.l.b16 %v445
    %v484 = vpack.c.b16 %v469, %v468
    %v485 = vpack.c.b16 %v471, %v470
    %v486 = vpack.c.b16 %v473, %v472
    %v487 = vpack.c.b16 %v475, %v474
    %v488 = vpack.c.b16 %v477, %v476
    %v489 = vpack.c.b16 %v479, %v478
    %v490 = vpack.c.b16 %v481, %v480
    %v491 = vpack.c.b16 %v483, %v482
    %500 = vmatprep.subr.bf16.mxu0 0
    %501 = vmatpush1.bf16.msra.mxu0 %v484
    %502 = vmatprep.subr.bf16.mxu0 0
    %503 = vmatpush1.bf16.msra.mxu0 %v485
    %504 = vmatprep.subr.bf16.mxu0 0
    %505 = vmatpush1.bf16.msra.mxu0 %v486
    %506 = vmatprep.subr.bf16.mxu0 0
    %507 = vmatpush1.bf16.msra.mxu0 %v487
    %508 = vmatprep.subr.bf16.mxu0 0
    %509 = vmatpush1.bf16.msra.mxu0 %v488
    %510 = vmatprep.subr.bf16.mxu0 0
    %511 = vmatpush1.bf16.msra.mxu0 %v489
    %512 = vmatprep.subr.bf16.mxu0 0
    %513 = vmatpush1.bf16.msra.mxu0 %v490
    %514 = vmatprep.subr.bf16.mxu0 0
    %515 = vmatpush1.bf16.msra.mxu0 %v491
    %516 = vmatprep.subr.bf16.mxu0 0
    %517 = vmatpush1.bf16.msra.mxu0 0
    %518 = vmatprep.subr.bf16.mxu0 0
    %519 = vmatpush1.bf16.msra.mxu0 0
    %520 = vmatprep.subr.bf16.mxu0 0
    %521 = vmatpush1.bf16.msra.mxu0 0
    %522 = vmatprep.subr.bf16.mxu0 0
    %523 = vmatpush1.bf16.msra.mxu0 0
    %524 = vmatprep.subr.bf16.mxu0 0
    %525 = vmatpush1.bf16.msra.mxu0 0
    %526 = vmatprep.subr.bf16.mxu0 0
    %527 = vmatpush1.bf16.msra.mxu0 0
    %528 = vmatprep.subr.bf16.mxu0 0
    %529 = vmatpush1.bf16.msra.mxu0 0
    %530 = vmatprep.subr.bf16.mxu0 0
    %531 = vmatpush1.bf16.msra.mxu0 0
    %532 = vmatprep.mubr.bf16.mxu0 0
    %533 = vmatmul.mubr.bf16.gmra.mrb[0].mxu0 %v429
    %v534 = vpop.f32.mrb[0].mxu0
    %v535 = vadd.f32 %v450, %v534
    %v536 = vpop.f32.mrb[0].mxu0
    %v537 = vpop.f32.mrb[0].mxu0
    %v538 = vpop.f32.mrb[0].mxu0
    %539 = vdwg.mxu0
    %540 = vst [vmem:[#allocation11] sm:$0xff] %v535
    // Predicated region
    $region54: #{tpu_custom_call.1} parent=1 // pred_check
      _
    $region55: #{tpu_custom_call.1} parent=1 // pred_check_branch
      %542 = sbr.rel (0) target = $region57
    $region56: #{tpu_custom_call.1} parent=1 // pred_region
      %s544 = ssub.s32 128, 128
      %545 = vsyncadd [#allocation4], %s544
      %s547 = sshll.u32 [#allocation11], 4
      %s548 = int_to_ptr.vmem [resolvable:$true] %s547
      %550 = dma.vmem_to_hbm [thread:$0]  %s548, 128, %s8, [#allocation4]
    $region57: #{tpu_custom_call.1} parent=1 // pred_fallthru
      _
    // Predicated region
    $region58: #{tpu_custom_call.1} parent=1 // pred_check
      _
    $region59: #{tpu_custom_call.1} parent=1 // pred_check_branch
      %552 = sbr.rel (0) target = $region61
    $region60: #{tpu_custom_call.1} parent=1 // pred_region
      %553 = dma.done [#allocation4], 128
    $region61: #{tpu_custom_call.1} parent=1 // pred_fallthru
      _
    %554 = vsyncpa [#allocation3], 1
    %555 = vsyncpa [#allocation6], 1
    %556 = vsyncpa [#allocation9], 1
    %557 = vsyncpa [#allocation4], 1

</llo_original>
